<compile_context>
chip_gen: v7x
topology: tpu7x:2x2x1
jax: 0.10.0
libtpu: 0.0.40
codegen_flags: <defaults>
</compile_context>

<pallas_src>
import jax
import jax.numpy as jnp
from jax.experimental import pallas as pl
from jax.experimental.pallas import tpu as pltpu

LANE = 128
SUBLANE = 16  # bf16 sublane packing granularity


def timing_gnn_kernel(a_ref, x_ref,
                      w1_ref, t1_ref,
                      w2_ref, t2_ref,
                      w3_ref, t3_ref,
                      wf_ref, bf_ref,
                      o_ref):
    a = a_ref[...]                                   # (N, N) bf16 normalized adjacency

    # --- layer 1: reordered contraction (a @ x) @ W1' + t1' -------------------
    ax = jnp.dot(a, x_ref[...], preferred_element_type=jnp.float32)      # (N, Cin)
    h1 = jnp.dot(ax.astype(jnp.bfloat16), w1_ref[...],
                 preferred_element_type=jnp.float32) + t1_ref[...]
    h1 = jnp.maximum(h1, 0.0)
    # TODO(synk): Dropout(p=0.3) is identity at inference; omitted on purpose.
    residual = h1

    def gcn_layer(h, w_ref, t_ref):
        # relu( a_hat @ (h @ W') + t' ) ; BN scale/shift and conv bias pre-folded.
        hw = jnp.dot(h.astype(jnp.bfloat16), w_ref[...],
                     preferred_element_type=jnp.float32)
        h = jnp.dot(a, hw.astype(jnp.bfloat16),
                    preferred_element_type=jnp.float32) + t_ref[...]
        return jnp.maximum(h, 0.0)

    h2 = gcn_layer(h1, w2_ref, t2_ref)
    h3 = gcn_layer(h2, w3_ref, t3_ref)
    h = (h3 + residual).astype(jnp.bfloat16)

    # fc head + sigmoid * 10 (lane-dense padded output, unmasked vst)
    out = jnp.dot(h, wf_ref[...], preferred_element_type=jnp.float32) + bf_ref[...]
    o_ref[...] = jax.nn.sigmoid(out) * 10.0


# ----------------------------- JAX-side glue ---------------------------------

def build_normalized_adjacency(edge_index, num_nodes):
    """a_hat = D^-1/2 (A + I) D^-1/2 , GCNConv convention (message j -> i).

    Scatter-add so parallel (duplicate) edges are counted, matching PyG
    GCNConv semantics.
    """
    src, dst = edge_index[0], edge_index[1]
    a = jnp.zeros((num_nodes, num_nodes), jnp.float32)
    a = a.at[dst, src].add(1.0)                      # row i gathers from neighbors j
    a = a + jnp.eye(num_nodes, dtype=jnp.float32)    # self loops
    deg = jnp.sum(a, axis=1)
    d_inv_sqrt = jnp.where(deg > 0, jax.lax.rsqrt(deg), 0.0)
    return a * d_inv_sqrt[:, None] * d_inv_sqrt[None, :]


def fold_gcn_bn(w, b, gamma, beta, running_mean, running_var, eps=1e-5):
    """Fold inference BatchNorm + GCN bias into the weights.

    (a@(x@W) + b) * s + t  ==  a @ (x @ (W*s)) + (b*s + t)
    """
    s = gamma * jax.lax.rsqrt(running_var + eps)
    t = beta - running_mean * s
    return w * s[None, :], b * s + t


def _round_up(n, m):
    return ((n + m - 1) // m) * m


def _pad_to(x, shape):
    return jnp.pad(x, [(0, t - s) for s, t in zip(x.shape, shape)])


def timing_gnn_forward(x, edge_index, params):
    n, in_dim = x.shape
    hid_dim = params["w2"].shape[0]
    out_dim = params["wf"].shape[1]

    n_p = _round_up(n, SUBLANE)
    in_p = _round_up(in_dim, LANE)
    hid_p = _round_up(hid_dim, LANE)
    out_p = _round_up(out_dim, LANE)

    # bf16 adjacency / activations / weights; f32 accumulation in-kernel.
    # Padded node rows/cols of a_hat are zero so they never contaminate real
    # nodes; their outputs are sliced away below.
    a_hat = build_normalized_adjacency(edge_index, n)
    a_hat = _pad_to(a_hat, (n_p, n_p)).astype(jnp.bfloat16)
    x_p = _pad_to(x, (n_p, in_p)).astype(jnp.bfloat16)

    w1, t1 = fold_gcn_bn(params["w1"], params["b1"], *params["bn1"])
    w2, t2 = fold_gcn_bn(params["w2"], params["b2"], *params["bn2"])
    w3, t3 = fold_gcn_bn(params["w3"], params["b3"], *params["bn3"])

    args = (
        a_hat, x_p,
        _pad_to(w1, (in_p, hid_p)).astype(jnp.bfloat16),  _pad_to(t1, (hid_p,))[None, :],
        _pad_to(w2, (hid_p, hid_p)).astype(jnp.bfloat16), _pad_to(t2, (hid_p,))[None, :],
        _pad_to(w3, (hid_p, hid_p)).astype(jnp.bfloat16), _pad_to(t3, (hid_p,))[None, :],
        _pad_to(params["wf"], (hid_p, out_p)).astype(jnp.bfloat16),
        _pad_to(params["bf"], (out_p,))[None, :],
    )

    # Advisory cost estimate so XLA schedules around the custom call sensibly.
    flops = 2 * (n_p * n_p * in_p + n_p * in_p * hid_p          # layer 1
                 + 2 * (n_p * hid_p * hid_p + n_p * n_p * hid_p)  # layers 2,3
                 + n_p * hid_p * out_p)                           # fc head
    bytes_accessed = sum(int(a.size) * a.dtype.itemsize for a in args) \
        + n_p * out_p * 4
    cost = pl.CostEstimate(flops=flops, transcendentals=n_p * out_p,
                           bytes_accessed=bytes_accessed)

    vmem = pl.BlockSpec(memory_space=pltpu.MemorySpace.VMEM)
    out_padded = pl.pallas_call(
        timing_gnn_kernel,
        out_shape=jax.ShapeDtypeStruct((n_p, out_p), jnp.float32),
        in_specs=[vmem] * len(args),
        out_specs=vmem,
        cost_estimate=cost,
        compiler_params=pltpu.CompilerParams(vmem_limit_bytes=32 * 1024 * 1024),
    )(*args)
    return out_padded[:n, :out_dim]


def init_params(key, input_dim, hidden_dim, output_dim):
    ks = jax.random.split(key, 8)

    def lin(k, fan_in, fan_out):
        bound = 1.0 / jnp.sqrt(fan_in)
        return jax.random.uniform(k, (fan_in, fan_out), jnp.float32, -bound, bound)

    params = {
        "w1": lin(ks[0], input_dim, hidden_dim),
        "b1": jnp.zeros((hidden_dim,), jnp.float32),
        "w2": lin(ks[1], hidden_dim, hidden_dim),
        "b2": jnp.zeros((hidden_dim,), jnp.float32),
        "w3": lin(ks[2], hidden_dim, hidden_dim),
        "b3": jnp.zeros((hidden_dim,), jnp.float32),
        "wf": lin(ks[3], hidden_dim, output_dim),
        "bf": jax.random.uniform(ks[4], (output_dim,), jnp.float32,
                                 -1.0 / jnp.sqrt(hidden_dim), 1.0 / jnp.sqrt(hidden_dim)),
    }
    # BatchNorm (gamma, beta, running_mean, running_var) — deterministic, non-trivial stats
    for i, name in enumerate(["bn1", "bn2", "bn3"]):
        params[name] = (
            jnp.ones((hidden_dim,), jnp.float32),                                 # gamma
            jnp.zeros((hidden_dim,), jnp.float32),                                # beta
            0.1 * jnp.sin(jnp.arange(hidden_dim, dtype=jnp.float32) + i),         # running_mean
            1.0 + 0.05 * jnp.cos(jnp.arange(hidden_dim, dtype=jnp.float32) + i),  # running_var
        )
    return params


if __name__ == "__main__":
    key = jax.random.PRNGKey(0)
    k_x, k_e, k_p = jax.random.split(key, 3)

    num_nodes, input_dim, hidden_dim, output_dim = 64, 16, 32, 4
    num_edges = 256

    x = jax.random.normal(k_x, (num_nodes, input_dim), jnp.float32)
    edge_index = jax.random.randint(k_e, (2, num_edges), 0, num_nodes, jnp.int32)

    params = init_params(k_p, input_dim, hidden_dim, output_dim)

    out = timing_gnn_forward(x, edge_index, params)
    jax.block_until_ready(out)

    assert out.shape == (num_nodes, output_dim)
    assert bool(jnp.all(jnp.isfinite(out)))
    assert bool(jnp.all((out >= 0.0) & (out <= 10.0)))   # sigmoid * 10 range
    print("KERNEL_OK")
</pallas_src>

<mosaic_0001>
module attributes {stable_mosaic.version = 11 : i64} {
  func.func @timing_gnn_kernel(%arg0: memref<64x64xbf16, #tpu.memory_space<vmem>>, %arg1: memref<64x128xbf16, #tpu.memory_space<vmem>>, %arg2: memref<128x128xbf16, #tpu.memory_space<vmem>>, %arg3: memref<1x128xf32, #tpu.memory_space<vmem>>, %arg4: memref<128x128xbf16, #tpu.memory_space<vmem>>, %arg5: memref<1x128xf32, #tpu.memory_space<vmem>>, %arg6: memref<128x128xbf16, #tpu.memory_space<vmem>>, %arg7: memref<1x128xf32, #tpu.memory_space<vmem>>, %arg8: memref<128x128xbf16, #tpu.memory_space<vmem>>, %arg9: memref<1x128xf32, #tpu.memory_space<vmem>>, %arg10: memref<64x128xf32, #tpu.memory_space<vmem>>) attributes {dimension_semantics = [], scalar_prefetch = 0 : i64, scratch_operands = 0 : i64, tpu.core_type = #tpu.core_type<tc>} {
    %c0 = arith.constant 0 : index
    %c0_0 = arith.constant 0 : index
    %0 = vector.load %arg0[%c0, %c0_0] : memref<64x64xbf16, #tpu.memory_space<vmem>>, vector<64x64xbf16>
    %c0_1 = arith.constant 0 : index
    %c0_2 = arith.constant 0 : index
    %1 = vector.load %arg1[%c0_1, %c0_2] : memref<64x128xbf16, #tpu.memory_space<vmem>>, vector<64x128xbf16>
    %cst = arith.constant dense<0.000000e+00> : vector<64x128xf32>
    %2 = tpu.matmul %0, %1, %cst {dimension_numbers = #tpu.dot_dimension_numbers<[1], [0], [0], [1], [0, 0, 1, 1], [], []>} : vector<64x64xbf16>, vector<64x128xbf16>, vector<64x128xf32> -> vector<64x128xf32>
    %3 = arith.truncf %2 : vector<64x128xf32> to vector<64x128xbf16>
    %c0_3 = arith.constant 0 : index
    %c0_4 = arith.constant 0 : index
    %4 = vector.load %arg2[%c0_3, %c0_4] : memref<128x128xbf16, #tpu.memory_space<vmem>>, vector<128x128xbf16>
    %cst_5 = arith.constant dense<0.000000e+00> : vector<64x128xf32>
    %5 = tpu.matmul %3, %4, %cst_5 {dimension_numbers = #tpu.dot_dimension_numbers<[1], [0], [0], [1], [0, 0, 1, 1], [], []>} : vector<64x128xbf16>, vector<128x128xbf16>, vector<64x128xf32> -> vector<64x128xf32>
    %c0_6 = arith.constant 0 : index
    %c0_7 = arith.constant 0 : index
    %6 = vector.load %arg3[%c0_6, %c0_7] : memref<1x128xf32, #tpu.memory_space<vmem>>, vector<1x128xf32>
    %7 = vector.broadcast %6 : vector<1x128xf32> to vector<64x128xf32>
    %8 = arith.addf %5, %7 : vector<64x128xf32>
    %cst_8 = arith.constant 0.000000e+00 : f32
    %9 = vector.broadcast %cst_8 : f32 to vector<64x128xf32>
    %10 = arith.maximumf %8, %9 : vector<64x128xf32>
    %11 = arith.truncf %10 : vector<64x128xf32> to vector<64x128xbf16>
    %c0_9 = arith.constant 0 : index
    %c0_10 = arith.constant 0 : index
    %12 = vector.load %arg4[%c0_9, %c0_10] : memref<128x128xbf16, #tpu.memory_space<vmem>>, vector<128x128xbf16>
    %cst_11 = arith.constant dense<0.000000e+00> : vector<64x128xf32>
    %13 = tpu.matmul %11, %12, %cst_11 {dimension_numbers = #tpu.dot_dimension_numbers<[1], [0], [0], [1], [0, 0, 1, 1], [], []>} : vector<64x128xbf16>, vector<128x128xbf16>, vector<64x128xf32> -> vector<64x128xf32>
    %14 = arith.truncf %13 : vector<64x128xf32> to vector<64x128xbf16>
    %cst_12 = arith.constant dense<0.000000e+00> : vector<64x128xf32>
    %15 = tpu.matmul %0, %14, %cst_12 {dimension_numbers = #tpu.dot_dimension_numbers<[1], [0], [0], [1], [0, 0, 1, 1], [], []>} : vector<64x64xbf16>, vector<64x128xbf16>, vector<64x128xf32> -> vector<64x128xf32>
    %c0_13 = arith.constant 0 : index
    %c0_14 = arith.constant 0 : index
    %16 = vector.load %arg5[%c0_13, %c0_14] : memref<1x128xf32, #tpu.memory_space<vmem>>, vector<1x128xf32>
    %17 = vector.broadcast %16 : vector<1x128xf32> to vector<64x128xf32>
    %18 = arith.addf %15, %17 : vector<64x128xf32>
    %cst_15 = arith.constant 0.000000e+00 : f32
    %19 = vector.broadcast %cst_15 : f32 to vector<64x128xf32>
    %20 = arith.maximumf %18, %19 : vector<64x128xf32>
    %21 = arith.truncf %20 : vector<64x128xf32> to vector<64x128xbf16>
    %c0_16 = arith.constant 0 : index
    %c0_17 = arith.constant 0 : index
    %22 = vector.load %arg6[%c0_16, %c0_17] : memref<128x128xbf16, #tpu.memory_space<vmem>>, vector<128x128xbf16>
    %cst_18 = arith.constant dense<0.000000e+00> : vector<64x128xf32>
    %23 = tpu.matmul %21, %22, %cst_18 {dimension_numbers = #tpu.dot_dimension_numbers<[1], [0], [0], [1], [0, 0, 1, 1], [], []>} : vector<64x128xbf16>, vector<128x128xbf16>, vector<64x128xf32> -> vector<64x128xf32>
    %24 = arith.truncf %23 : vector<64x128xf32> to vector<64x128xbf16>
    %cst_19 = arith.constant dense<0.000000e+00> : vector<64x128xf32>
    %25 = tpu.matmul %0, %24, %cst_19 {dimension_numbers = #tpu.dot_dimension_numbers<[1], [0], [0], [1], [0, 0, 1, 1], [], []>} : vector<64x64xbf16>, vector<64x128xbf16>, vector<64x128xf32> -> vector<64x128xf32>
    %c0_20 = arith.constant 0 : index
    %c0_21 = arith.constant 0 : index
    %26 = vector.load %arg7[%c0_20, %c0_21] : memref<1x128xf32, #tpu.memory_space<vmem>>, vector<1x128xf32>
    %27 = vector.broadcast %26 : vector<1x128xf32> to vector<64x128xf32>
    %28 = arith.addf %25, %27 : vector<64x128xf32>
    %cst_22 = arith.constant 0.000000e+00 : f32
    %29 = vector.broadcast %cst_22 : f32 to vector<64x128xf32>
    %30 = arith.maximumf %28, %29 : vector<64x128xf32>
    %31 = arith.addf %30, %10 : vector<64x128xf32>
    %32 = arith.truncf %31 : vector<64x128xf32> to vector<64x128xbf16>
    %c0_23 = arith.constant 0 : index
    %c0_24 = arith.constant 0 : index
    %33 = vector.load %arg8[%c0_23, %c0_24] : memref<128x128xbf16, #tpu.memory_space<vmem>>, vector<128x128xbf16>
    %cst_25 = arith.constant dense<0.000000e+00> : vector<64x128xf32>
    %34 = tpu.matmul %32, %33, %cst_25 {dimension_numbers = #tpu.dot_dimension_numbers<[1], [0], [0], [1], [0, 0, 1, 1], [], []>} : vector<64x128xbf16>, vector<128x128xbf16>, vector<64x128xf32> -> vector<64x128xf32>
    %c0_26 = arith.constant 0 : index
    %c0_27 = arith.constant 0 : index
    %35 = vector.load %arg9[%c0_26, %c0_27] : memref<1x128xf32, #tpu.memory_space<vmem>>, vector<1x128xf32>
    %36 = vector.broadcast %35 : vector<1x128xf32> to vector<64x128xf32>
    %37 = arith.addf %34, %36 : vector<64x128xf32>
    %38 = arith.negf %37 : vector<64x128xf32>
    %39 = math.exp %38 : vector<64x128xf32>
    %cst_28 = arith.constant 1.000000e+00 : f32
    %40 = vector.broadcast %cst_28 : f32 to vector<64x128xf32>
    %41 = arith.addf %40, %39 : vector<64x128xf32>
    %42 = arith.divf %40, %41 : vector<64x128xf32>
    %cst_29 = arith.constant 1.000000e+01 : f32
    %43 = vector.broadcast %cst_29 : f32 to vector<64x128xf32>
    %44 = arith.mulf %42, %43 : vector<64x128xf32>
    %c0_30 = arith.constant 0 : index
    %c0_31 = arith.constant 0 : index
    %45 = vector.load %arg10[%c0_30, %c0_31] : memref<64x128xf32, #tpu.memory_space<vmem>>, vector<64x128xf32>
    tpu.vector_store %arg10[%c0_30, %c0_31], %44 {strides = array<i32>} : memref<64x128xf32, #tpu.memory_space<vmem>>, vector<64x128xf32>,
    return
  }
}

</mosaic_0001>

<llo_original>
// kernel: tpu_custom_call.1
$region0: #{tpu_custom_call.1}
  #allocation0 [shape = 'u32[]', space=smem, size = 0x4, offset = 0x4, fixed_abs, tag = 'smem constant byte address 0x4 - core index']
  #allocation1 [shape = 'u32[144,128]{1,0:T(1,128)}', space=vmem, size = 0x12000, scoped, tag = 'internal scratch']
  %s0 = inlined_call_operand.hbm [shape: bf16[64,64], index: 0, kind: input, shape index: {}]
  %s1 = inlined_call_operand.hbm [shape: bf16[64,128], index: 1, kind: input, shape index: {}]
  %s2 = inlined_call_operand.hbm [shape: bf16[128,128], index: 2, kind: input, shape index: {}]
  %s3 = inlined_call_operand.vmem [shape: f32[1,128], index: 3, kind: input, shape index: {}]
  %s4 = inlined_call_operand.hbm [shape: bf16[128,128], index: 4, kind: input, shape index: {}]
  %s5 = inlined_call_operand.vmem [shape: f32[1,128], index: 5, kind: input, shape index: {}]
  %s6 = inlined_call_operand.hbm [shape: bf16[128,128], index: 6, kind: input, shape index: {}]
  %s7 = inlined_call_operand.vmem [shape: f32[1,128], index: 7, kind: input, shape index: {}]
  %s8 = inlined_call_operand.hbm [shape: bf16[128,128], index: 8, kind: input, shape index: {}]
  %s9 = inlined_call_operand.vmem [shape: f32[1,128], index: 9, kind: input, shape index: {}]
  %s10 = inlined_call_operand.hbm [shape: f32[64,128], index: 10, kind: output, shape index: {}]
  %s11 = sld [smem:[#allocation0]]
  $region74: #{tpu_custom_call.1} parent=0
    _
  %s13 = ssub.s32 1, %s11
  %s14 = scalar_select 0, %s13, %s11
  $region1: #{tpu_custom_call.1} parent=0
    #allocation2 [shape = 'u8[16384]{0}', space=vmem, size = 0x4000, scoped, tag = 'input window, operand 0, single buffered']
    #allocation3 [shape = 's32[1]{0}', space=sflag, size = 0x4, scoped, tag = 'scoped memory for tpu_custom_call.1']
    #allocation4 [shape = 's32[1]{0}', space=sflag, size = 0x4, scoped, tag = 'scoped memory for tpu_custom_call.1']
    #allocation5 [shape = 'u8[16384]{0}', space=vmem, size = 0x4000, scoped, tag = 'input window, operand 1, single buffered']
    #allocation6 [shape = 's32[1]{0}', space=sflag, size = 0x4, scoped, tag = 'scoped memory for tpu_custom_call.1']
    #allocation7 [shape = 'u8[32768]{0}', space=vmem, size = 0x8000, scoped, tag = 'input window, operand 2, single buffered']
    #allocation8 [shape = 'u8[32768]{0}', space=vmem, size = 0x8000, scoped, tag = 'input window, operand 4, single buffered']
    #allocation9 [shape = 's32[1]{0}', space=sflag, size = 0x4, scoped, tag = 'scoped memory for tpu_custom_call.1']
    #allocation10 [shape = 'u8[32768]{0}', space=vmem, size = 0x8000, scoped, tag = 'input window, operand 6, single buffered']
    #allocation11 [shape = 'u8[32768]{0}', space=vmem, size = 0x8000, scoped, tag = 'input window, operand 8, single buffered']
    #allocation12 [shape = 's32[1]{0}', space=sflag, size = 0x4, scoped, tag = 'scoped memory for tpu_custom_call.1']
    #allocation13 [shape = 'u8[32768]{0}', space=vmem, size = 0x8000, scoped, tag = 'output window, operand 0, single buffered']
    %15 = vsyncpa [#allocation3], 0
    %16 = vsyncpa [#allocation6], 0
    %17 = vsyncpa [#allocation9], 0
    %18 = vsyncpa [#allocation12], 0
    %19 = vsyncpa [#allocation4], 0
    // Predicated region
    $region2: #{tpu_custom_call.1} parent=1 // pred_check
      _
    $region3: #{tpu_custom_call.1} parent=1 // pred_check_branch
      %21 = sbr.rel (0) target = $region5
    $region4: #{tpu_custom_call.1} parent=1 // pred_region
      %s23 = ssub.s32 512, 512
      %24 = vsyncadd [#allocation3], %s23
      %s25 = sshll.u32 [#allocation2], 4
      %s26 = int_to_ptr.vmem [resolvable:$true] %s25
      %31 = dma.hbm_to_vmem [thread:$0]  %s0, 512, %s26, [#allocation3], 64, 64, 4
    $region5: #{tpu_custom_call.1} parent=1 // pred_fallthru
      _
    // Predicated region
    $region6: #{tpu_custom_call.1} parent=1 // pred_check
      _
    $region7: #{tpu_custom_call.1} parent=1 // pred_check_branch
      %33 = sbr.rel (0) target = $region9
    $region8: #{tpu_custom_call.1} parent=1 // pred_region
      %s35 = ssub.s32 512, 512
      %36 = vsyncadd [#allocation6], %s35
      %s37 = sshll.u32 [#allocation5], 4
      %s38 = int_to_ptr.vmem [resolvable:$true] %s37
      %43 = dma.hbm_to_vmem [thread:$0]  %s1, 512, %s38, [#allocation6], 64, 64, 4
    $region9: #{tpu_custom_call.1} parent=1 // pred_fallthru
      _
    // Predicated region
    $region10: #{tpu_custom_call.1} parent=1 // pred_check
      _
    $region11: #{tpu_custom_call.1} parent=1 // pred_check_branch
      %45 = sbr.rel (0) target = $region13
    $region12: #{tpu_custom_call.1} parent=1 // pred_region
      %s47 = ssub.s32 1024, 1024
      %48 = vsyncadd [#allocation6], %s47
      %s49 = sshll.u32 [#allocation7], 4
      %s50 = int_to_ptr.vmem [resolvable:$true] %s49
      %55 = dma.hbm_to_vmem [thread:$0]  %s2, 1024, %s50, [#allocation6], 64, 64, 4
    $region13: #{tpu_custom_call.1} parent=1 // pred_fallthru
      _
    // Predicated region
    $region14: #{tpu_custom_call.1} parent=1 // pred_check
      _
    $region15: #{tpu_custom_call.1} parent=1 // pred_check_branch
      %57 = sbr.rel (0) target = $region17
    $region16: #{tpu_custom_call.1} parent=1 // pred_region
      _
    $region17: #{tpu_custom_call.1} parent=1 // pred_fallthru
      _
    // Predicated region
    $region18: #{tpu_custom_call.1} parent=1 // pred_check
      _
    $region19: #{tpu_custom_call.1} parent=1 // pred_check_branch
      %59 = sbr.rel (0) target = $region21
    $region20: #{tpu_custom_call.1} parent=1 // pred_region
      %s61 = ssub.s32 1024, 1024
      %62 = vsyncadd [#allocation9], %s61
      %s63 = sshll.u32 [#allocation8], 4
      %s64 = int_to_ptr.vmem [resolvable:$true] %s63
      %69 = dma.hbm_to_vmem [thread:$0]  %s4, 1024, %s64, [#allocation9], 64, 64, 4
    $region21: #{tpu_custom_call.1} parent=1 // pred_fallthru
      _
    // Predicated region
    $region22: #{tpu_custom_call.1} parent=1 // pred_check
      _
    $region23: #{tpu_custom_call.1} parent=1 // pred_check_branch
      %71 = sbr.rel (0) target = $region25
    $region24: #{tpu_custom_call.1} parent=1 // pred_region
      _
    $region25: #{tpu_custom_call.1} parent=1 // pred_fallthru
      _
    // Predicated region
    $region26: #{tpu_custom_call.1} parent=1 // pred_check
      _
    $region27: #{tpu_custom_call.1} parent=1 // pred_check_branch
      %73 = sbr.rel (0) target = $region29
    $region28: #{tpu_custom_call.1} parent=1 // pred_region
      %s75 = ssub.s32 1024, 1024
      %76 = vsyncadd [#allocation9], %s75
      %s77 = sshll.u32 [#allocation10], 4
      %s78 = int_to_ptr.vmem [resolvable:$true] %s77
      %83 = dma.hbm_to_vmem [thread:$0]  %s6, 1024, %s78, [#allocation9], 64, 64, 4
    $region29: #{tpu_custom_call.1} parent=1 // pred_fallthru
      _
    // Predicated region
    $region30: #{tpu_custom_call.1} parent=1 // pred_check
      _
    $region31: #{tpu_custom_call.1} parent=1 // pred_check_branch
      %85 = sbr.rel (0) target = $region33
    $region32: #{tpu_custom_call.1} parent=1 // pred_region
      _
    $region33: #{tpu_custom_call.1} parent=1 // pred_fallthru
      _
    // Predicated region
    $region34: #{tpu_custom_call.1} parent=1 // pred_check
      _
    $region35: #{tpu_custom_call.1} parent=1 // pred_check_branch
      %87 = sbr.rel (0) target = $region37
    $region36: #{tpu_custom_call.1} parent=1 // pred_region
      %s89 = ssub.s32 1024, 1024
      %90 = vsyncadd [#allocation12], %s89
      %s91 = sshll.u32 [#allocation11], 4
      %s92 = int_to_ptr.vmem [resolvable:$true] %s91
      %97 = dma.hbm_to_vmem [thread:$0]  %s8, 1024, %s92, [#allocation12], 64, 64, 4
    $region37: #{tpu_custom_call.1} parent=1 // pred_fallthru
      _
    // Predicated region
    $region38: #{tpu_custom_call.1} parent=1 // pred_check
      _
    $region39: #{tpu_custom_call.1} parent=1 // pred_check_branch
      %99 = sbr.rel (0) target = $region41
    $region40: #{tpu_custom_call.1} parent=1 // pred_region
      _
    $region41: #{tpu_custom_call.1} parent=1 // pred_fallthru
      _
    // Predicated region
    $region42: #{tpu_custom_call.1} parent=1 // pred_check
      _
    $region43: #{tpu_custom_call.1} parent=1 // pred_check_branch
      %101 = sbr.rel (0) target = $region45
    $region44: #{tpu_custom_call.1} parent=1 // pred_region
      %102 = dma.done [#allocation3], 512
    $region45: #{tpu_custom_call.1} parent=1 // pred_fallthru
      _
    // Predicated region
    $region46: #{tpu_custom_call.1} parent=1 // pred_check
      _
    $region47: #{tpu_custom_call.1} parent=1 // pred_check_branch
      %104 = sbr.rel (0) target = $region49
    $region48: #{tpu_custom_call.1} parent=1 // pred_region
      %105 = dma.done [#allocation6], 512
    $region49: #{tpu_custom_call.1} parent=1 // pred_fallthru
      _
    // Predicated region
    $region50: #{tpu_custom_call.1} parent=1 // pred_check
      _
    $region51: #{tpu_custom_call.1} parent=1 // pred_check_branch
      %107 = sbr.rel (0) target = $region53
    $region52: #{tpu_custom_call.1} parent=1 // pred_region
      %108 = dma.done [#allocation6], 1024
    $region53: #{tpu_custom_call.1} parent=1 // pred_fallthru
      _
    // Predicated region
    $region54: #{tpu_custom_call.1} parent=1 // pred_check
      _
    $region55: #{tpu_custom_call.1} parent=1 // pred_check_branch
      %110 = sbr.rel (0) target = $region57
    $region56: #{tpu_custom_call.1} parent=1 // pred_region
      %111 = dma.done [#allocation9], 1024
    $region57: #{tpu_custom_call.1} parent=1 // pred_fallthru
      _
    // Predicated region
    $region58: #{tpu_custom_call.1} parent=1 // pred_check
      _
    $region59: #{tpu_custom_call.1} parent=1 // pred_check_branch
      %113 = sbr.rel (0) target = $region61
    $region60: #{tpu_custom_call.1} parent=1 // pred_region
      %114 = dma.done [#allocation9], 1024
    $region61: #{tpu_custom_call.1} parent=1 // pred_fallthru
      _
    // Predicated region
    $region62: #{tpu_custom_call.1} parent=1 // pred_check
      _
    $region63: #{tpu_custom_call.1} parent=1 // pred_check_branch
      %116 = sbr.rel (0) target = $region65
    $region64: #{tpu_custom_call.1} parent=1 // pred_region
      %117 = dma.done [#allocation12], 1024
    $region65: #{tpu_custom_call.1} parent=1 // pred_fallthru
      _
    %v119 = vld [vmem:[#allocation2] sm:$0xf]
    %v120 = vld [vmem:[#allocation2 + $0x4] sm:$0xf]
    %v121 = vld [vmem:[#allocation2 + $0x8] sm:$0xf]
    %v122 = vld [vmem:[#allocation2 + $0xc] sm:$0xf]
    %v123 = vld [vmem:[#allocation2 + $0x10] sm:$0xf]
    %v124 = vld [vmem:[#allocation2 + $0x14] sm:$0xf]
    %v125 = vld [vmem:[#allocation2 + $0x18] sm:$0xf]
    %v126 = vld [vmem:[#allocation2 + $0x1c] sm:$0xf]
    %v127 = vld [vmem:[#allocation5] sm:$0xf]
    %v128 = vld [vmem:[#allocation5 + $0x4] sm:$0xf]
    %v129 = vld [vmem:[#allocation5 + $0x8] sm:$0xf]
    %v130 = vld [vmem:[#allocation5 + $0xc] sm:$0xf]
    %v131 = vld [vmem:[#allocation5 + $0x10] sm:$0xf]
    %v132 = vld [vmem:[#allocation5 + $0x14] sm:$0xf]
    %v133 = vld [vmem:[#allocation5 + $0x18] sm:$0xf]
    %v134 = vld [vmem:[#allocation5 + $0x1c] sm:$0xf]
    %v143 = vunpack.c.l.b16 %v119
    %v144 = vunpack.c.l.b16 %v120
    %v145 = vunpack.c.l.b16 %v121
    %v146 = vunpack.c.l.b16 %v122
    %v147 = vunpack.c.l.b16 %v123
    %v148 = vunpack.c.l.b16 %v124
    %v149 = vunpack.c.l.b16 %v125
    %v150 = vunpack.c.l.b16 %v126
    %v151 = vpack.c.b16 %v144, %v143
    %v152 = vpack.c.b16 %v146, %v145
    %v153 = vpack.c.b16 %v148, %v147
    %v154 = vpack.c.b16 %v150, %v149
    %v163 = vunpack.c.l.b16 %v127
    %v164 = vunpack.c.l.b16 %v128
    %v165 = vunpack.c.l.b16 %v129
    %v166 = vunpack.c.l.b16 %v130
    %v167 = vunpack.c.l.b16 %v131
    %v168 = vunpack.c.l.b16 %v132
    %v169 = vunpack.c.l.b16 %v133
    %v170 = vunpack.c.l.b16 %v134
    %v171 = vpack.c.b16 %v164, %v163
    %v172 = vpack.c.b16 %v166, %v165
    %v173 = vpack.c.b16 %v168, %v167
    %v174 = vpack.c.b16 %v170, %v169
    %vm179 = vcmask 523264
    %v181 = vsel %vm179, %v151, 0
    %v184 = vsel %vm179, %v152, 0
    %v187 = vsel %vm179, %v153, 0
    %v190 = vsel %vm179, %v154, 0
    %192 = vmatprep.subr.bf16.mxu0 0
    %193 = vmatpush1.bf16.msra.mxu0 %v171
    %194 = vmatprep.subr.bf16.mxu0 0
    %195 = vmatpush1.bf16.msra.mxu0 %v172
    %196 = vmatprep.subr.bf16.mxu0 0
    %197 = vmatpush1.bf16.msra.mxu0 %v173
    %198 = vmatprep.subr.bf16.mxu0 0
    %199 = vmatpush1.bf16.msra.mxu0 %v174
    %200 = vmatprep.subr.bf16.mxu0 0
    %201 = vmatpush1.bf16.msra.mxu0 0
    %202 = vmatprep.subr.bf16.mxu0 0
    %203 = vmatpush1.bf16.msra.mxu0 0
    %204 = vmatprep.subr.bf16.mxu0 0
    %205 = vmatpush1.bf16.msra.mxu0 0
    %206 = vmatprep.subr.bf16.mxu0 0
    %207 = vmatpush1.bf16.msra.mxu0 0
    %208 = vmatprep.subr.bf16.mxu0 0
    %209 = vmatpush1.bf16.msra.mxu0 0
    %210 = vmatprep.subr.bf16.mxu0 0
    %211 = vmatpush1.bf16.msra.mxu0 0
    %212 = vmatprep.subr.bf16.mxu0 0
    %213 = vmatpush1.bf16.msra.mxu0 0
    %214 = vmatprep.subr.bf16.mxu0 0
    %215 = vmatpush1.bf16.msra.mxu0 0
    %216 = vmatprep.subr.bf16.mxu0 0
    %217 = vmatpush1.bf16.msra.mxu0 0
    %218 = vmatprep.subr.bf16.mxu0 0
    %219 = vmatpush1.bf16.msra.mxu0 0
    %220 = vmatprep.subr.bf16.mxu0 0
    %221 = vmatpush1.bf16.msra.mxu0 0
    %222 = vmatprep.subr.bf16.mxu0 0
    %223 = vmatpush1.bf16.msra.mxu0 0
    %224 = vmatprep.mubr.bf16.mxu0 0
    %225 = vmatmul.mubr.bf16.gmra.mrb[0].mxu0 %v181
    %v226 = vpop.f32.mrb[0].mxu0
    %v227 = vadd.f32 0.0, %v226
    %v228 = vpop.f32.mrb[0].mxu0
    %v229 = vpop.f32.mrb[0].mxu0
    %v230 = vadd.f32 0.0, %v229
    %v231 = vpop.f32.mrb[0].mxu0
    %232 = vmatprep.mubr.bf16.mxu0 0
    %233 = vmatmul.mubr.bf16.gmra.mrb[0].mxu0 %v184
    %v234 = vpop.f32.mrb[0].mxu0
    %v235 = vadd.f32 0.0, %v234
    %v236 = vpop.f32.mrb[0].mxu0
    %v237 = vpop.f32.mrb[0].mxu0
    %v238 = vadd.f32 0.0, %v237
    %v239 = vpop.f32.mrb[0].mxu0
    %240 = vmatprep.mubr.bf16.mxu0 0
    %241 = vmatmul.mubr.bf16.gmra.mrb[0].mxu0 %v187
    %v242 = vpop.f32.mrb[0].mxu0
    %v243 = vadd.f32 0.0, %v242
    %v244 = vpop.f32.mrb[0].mxu0
    %v245 = vpop.f32.mrb[0].mxu0
    %v246 = vadd.f32 0.0, %v245
    %v247 = vpop.f32.mrb[0].mxu0
    %248 = vmatprep.mubr.bf16.mxu0 0
    %249 = vmatmul.mubr.bf16.gmra.mrb[0].mxu0 %v190
    %v250 = vpop.f32.mrb[0].mxu0
    %v251 = vadd.f32 0.0, %v250
    %v252 = vpop.f32.mrb[0].mxu0
    %v253 = vpop.f32.mrb[0].mxu0
    %v254 = vadd.f32 0.0, %v253
    %v255 = vpop.f32.mrb[0].mxu0
    %256 = vdwg.mxu0
    %v257 = vpack.c.bf16 %v230, %v227
    %v258 = vpack.c.bf16 %v238, %v235
    %v259 = vpack.c.bf16 %v246, %v243
    %v260 = vpack.c.bf16 %v254, %v251
    %v261 = vld [vmem:[#allocation7] sm:$0xf]
    %v262 = vld [vmem:[#allocation7 + $0x4] sm:$0xf]
    %v263 = vld [vmem:[#allocation7 + $0x8] sm:$0xf]
    %v264 = vld [vmem:[#allocation7 + $0xc] sm:$0xf]
    %v265 = vld [vmem:[#allocation7 + $0x10] sm:$0xf]
    %v266 = vld [vmem:[#allocation7 + $0x14] sm:$0xf]
    %v267 = vld [vmem:[#allocation7 + $0x18] sm:$0xf]
    %v268 = vld [vmem:[#allocation7 + $0x1c] sm:$0xf]
    %v269 = vld [vmem:[#allocation7 + $0x20] sm:$0xf]
    %v270 = vld [vmem:[#allocation7 + $0x24] sm:$0xf]
    %v271 = vld [vmem:[#allocation7 + $0x28] sm:$0xf]
    %v272 = vld [vmem:[#allocation7 + $0x2c] sm:$0xf]
    %v273 = vld [vmem:[#allocation7 + $0x30] sm:$0xf]
    %v274 = vld [vmem:[#allocation7 + $0x34] sm:$0xf]
    %v275 = vld [vmem:[#allocation7 + $0x38] sm:$0xf]
    %v276 = vld [vmem:[#allocation7 + $0x3c] sm:$0xf]
    %v277 = vld [vmem:[%s3] sm:$0x1]
    %v279 = vlaneseq
    %v280 = vshrl.u32 %v279, 7
    %v281 = vsub.s32 0, %v280
    %v282 = vrot.slane %v277, %v281
    %v300 = vunpack.c.l.b16 %v261
    %v301 = vunpack.c.l.b16 %v262
    %v302 = vunpack.c.l.b16 %v263
    %v303 = vunpack.c.l.b16 %v264
    %v304 = vunpack.c.l.b16 %v265
    %v305 = vunpack.c.l.b16 %v266
    %v306 = vunpack.c.l.b16 %v267
    %v307 = vunpack.c.l.b16 %v268
    %v308 = vunpack.c.l.b16 %v269
    %v309 = vunpack.c.l.b16 %v270
    %v310 = vunpack.c.l.b16 %v271
    %v311 = vunpack.c.l.b16 %v272
    %v312 = vunpack.c.l.b16 %v273
    %v313 = vunpack.c.l.b16 %v274
    %v314 = vunpack.c.l.b16 %v275
    %v315 = vunpack.c.l.b16 %v276
    %v316 = vpack.c.b16 %v301, %v300
    %v317 = vpack.c.b16 %v303, %v302
    %v318 = vpack.c.b16 %v305, %v304
    %v319 = vpack.c.b16 %v307, %v306
    %v320 = vpack.c.b16 %v309, %v308
    %v321 = vpack.c.b16 %v311, %v310
    %v322 = vpack.c.b16 %v313, %v312
    %v323 = vpack.c.b16 %v315, %v314
    %332 = vmatprep.subr.bf16.mxu0 0
    %333 = vmatpush1.bf16.msra.mxu0 %v316
    %334 = vmatprep.subr.bf16.mxu0 0
    %335 = vmatpush1.bf16.msra.mxu0 %v317
    %336 = vmatprep.subr.bf16.mxu0 0
    %337 = vmatpush1.bf16.msra.mxu0 %v318
    %338 = vmatprep.subr.bf16.mxu0 0
    %339 = vmatpush1.bf16.msra.mxu0 %v319
    %340 = vmatprep.subr.bf16.mxu0 0
    %341 = vmatpush1.bf16.msra.mxu0 %v320
    %342 = vmatprep.subr.bf16.mxu0 0
    %343 = vmatpush1.bf16.msra.mxu0 %v321
    %344 = vmatprep.subr.bf16.mxu0 0
    %345 = vmatpush1.bf16.msra.mxu0 %v322
    %346 = vmatprep.subr.bf16.mxu0 0
    %347 = vmatpush1.bf16.msra.mxu0 %v323
    %348 = vmatprep.subr.bf16.mxu0 0
    %349 = vmatpush1.bf16.msra.mxu0 0
    %350 = vmatprep.subr.bf16.mxu0 0
    %351 = vmatpush1.bf16.msra.mxu0 0
    %352 = vmatprep.subr.bf16.mxu0 0
    %353 = vmatpush1.bf16.msra.mxu0 0
    %354 = vmatprep.subr.bf16.mxu0 0
    %355 = vmatpush1.bf16.msra.mxu0 0
    %356 = vmatprep.subr.bf16.mxu0 0
    %357 = vmatpush1.bf16.msra.mxu0 0
    %358 = vmatprep.subr.bf16.mxu0 0
    %359 = vmatpush1.bf16.msra.mxu0 0
    %360 = vmatprep.subr.bf16.mxu0 0
    %361 = vmatpush1.bf16.msra.mxu0 0
    %362 = vmatprep.subr.bf16.mxu0 0
    %363 = vmatpush1.bf16.msra.mxu0 0
    %364 = vmatprep.mubr.bf16.mxu0 0
    %365 = vmatmul.mubr.bf16.gmra.mrb[0].mxu0 %v257
    %v366 = vpop.f32.mrb[0].mxu0
    %v367 = vadd.f32 %v282, %v366
    %v368 = vpop.f32.mrb[0].mxu0
    %v369 = vpop.f32.mrb[0].mxu0
    %v370 = vadd.f32 %v282, %v369
    %v371 = vpop.f32.mrb[0].mxu0
    %372 = vmatprep.mubr.bf16.mxu0 0
    %373 = vmatmul.mubr.bf16.gmra.mrb[0].mxu0 %v258
    %v374 = vpop.f32.mrb[0].mxu0
    %v375 = vadd.f32 %v282, %v374
    %v376 = vpop.f32.mrb[0].mxu0
    %v377 = vpop.f32.mrb[0].mxu0
    %v378 = vadd.f32 %v282, %v377
    %v379 = vpop.f32.mrb[0].mxu0
    %380 = vmatprep.mubr.bf16.mxu0 0
    %381 = vmatmul.mubr.bf16.gmra.mrb[0].mxu0 %v259
    %v382 = vpop.f32.mrb[0].mxu0
    %v383 = vadd.f32 %v282, %v382
    %v384 = vpop.f32.mrb[0].mxu0
    %v385 = vpop.f32.mrb[0].mxu0
    %v386 = vadd.f32 %v282, %v385
    %v387 = vpop.f32.mrb[0].mxu0
    %388 = vmatprep.mubr.bf16.mxu0 0
    %389 = vmatmul.mubr.bf16.gmra.mrb[0].mxu0 %v260
    %v390 = vpop.f32.mrb[0].mxu0
    %v391 = vadd.f32 %v282, %v390
    %v392 = vpop.f32.mrb[0].mxu0
    %v393 = vpop.f32.mrb[0].mxu0
    %v394 = vadd.f32 %v282, %v393
    %v395 = vpop.f32.mrb[0].mxu0
    %396 = vdwg.mxu0
    %v397 = vmax.f32 %v367, 0.0
    %v398 = vmax.f32 %v370, 0.0
    %v399 = vmax.f32 %v375, 0.0
    %v400 = vmax.f32 %v378, 0.0
    %v401 = vmax.f32 %v383, 0.0
    %v402 = vmax.f32 %v386, 0.0
    %v403 = vmax.f32 %v391, 0.0
    %v404 = vmax.f32 %v394, 0.0
    %v405 = vpack.c.bf16 %v398, %v397
    %v406 = vpack.c.bf16 %v400, %v399
    %v407 = vpack.c.bf16 %v402, %v401
    %v408 = vpack.c.bf16 %v404, %v403
    %v409 = vld [vmem:[#allocation8] sm:$0xf]
    %v410 = vld [vmem:[#allocation8 + $0x4] sm:$0xf]
    %v411 = vld [vmem:[#allocation8 + $0x8] sm:$0xf]
    %v412 = vld [vmem:[#allocation8 + $0xc] sm:$0xf]
    %v413 = vld [vmem:[#allocation8 + $0x10] sm:$0xf]
    %v414 = vld [vmem:[#allocation8 + $0x14] sm:$0xf]
    %v415 = vld [vmem:[#allocation8 + $0x18] sm:$0xf]
    %v416 = vld [vmem:[#allocation8 + $0x1c] sm:$0xf]
    %v417 = vld [vmem:[#allocation8 + $0x20] sm:$0xf]
    %v418 = vld [vmem:[#allocation8 + $0x24] sm:$0xf]
    %v419 = vld [vmem:[#allocation8 + $0x28] sm:$0xf]
    %v420 = vld [vmem:[#allocation8 + $0x2c] sm:$0xf]
    %v421 = vld [vmem:[#allocation8 + $0x30] sm:$0xf]
    %v422 = vld [vmem:[#allocation8 + $0x34] sm:$0xf]
    %v423 = vld [vmem:[#allocation8 + $0x38] sm:$0xf]
    %v424 = vld [vmem:[#allocation8 + $0x3c] sm:$0xf]
    %v441 = vunpack.c.l.b16 %v409
    %v442 = vunpack.c.l.b16 %v410
    %v443 = vunpack.c.l.b16 %v411
    %v444 = vunpack.c.l.b16 %v412
    %v445 = vunpack.c.l.b16 %v413
    %v446 = vunpack.c.l.b16 %v414
    %v447 = vunpack.c.l.b16 %v415
    %v448 = vunpack.c.l.b16 %v416
    %v449 = vunpack.c.l.b16 %v417
    %v450 = vunpack.c.l.b16 %v418
    %v451 = vunpack.c.l.b16 %v419
    %v452 = vunpack.c.l.b16 %v420
    %v453 = vunpack.c.l.b16 %v421
    %v454 = vunpack.c.l.b16 %v422
    %v455 = vunpack.c.l.b16 %v423
    %v456 = vunpack.c.l.b16 %v424
    %v457 = vpack.c.b16 %v442, %v441
    %v458 = vpack.c.b16 %v444, %v443
    %v459 = vpack.c.b16 %v446, %v445
    %v460 = vpack.c.b16 %v448, %v447
    %v461 = vpack.c.b16 %v450, %v449
    %v462 = vpack.c.b16 %v452, %v451
    %v463 = vpack.c.b16 %v454, %v453
    %v464 = vpack.c.b16 %v456, %v455
    %473 = vmatprep.subr.bf16.mxu0 0
    %474 = vmatpush1.bf16.msra.mxu0 %v457
    %475 = vmatprep.subr.bf16.mxu0 0
    %476 = vmatpush1.bf16.msra.mxu0 %v458
    %477 = vmatprep.subr.bf16.mxu0 0
    %478 = vmatpush1.bf16.msra.mxu0 %v459
    %479 = vmatprep.subr.bf16.mxu0 0
    %480 = vmatpush1.bf16.msra.mxu0 %v460
    %481 = vmatprep.subr.bf16.mxu0 0
    %482 = vmatpush1.bf16.msra.mxu0 %v461
    %483 = vmatprep.subr.bf16.mxu0 0
    %484 = vmatpush1.bf16.msra.mxu0 %v462
    %485 = vmatprep.subr.bf16.mxu0 0
    %486 = vmatpush1.bf16.msra.mxu0 %v463
    %487 = vmatprep.subr.bf16.mxu0 0
    %488 = vmatpush1.bf16.msra.mxu0 %v464
    %489 = vmatprep.subr.bf16.mxu0 0
    %490 = vmatpush1.bf16.msra.mxu0 0
    %491 = vmatprep.subr.bf16.mxu0 0
    %492 = vmatpush1.bf16.msra.mxu0 0
    %493 = vmatprep.subr.bf16.mxu0 0
    %494 = vmatpush1.bf16.msra.mxu0 0
    %495 = vmatprep.subr.bf16.mxu0 0
    %496 = vmatpush1.bf16.msra.mxu0 0
    %497 = vmatprep.subr.bf16.mxu0 0
    %498 = vmatpush1.bf16.msra.mxu0 0
    %499 = vmatprep.subr.bf16.mxu0 0
    %500 = vmatpush1.bf16.msra.mxu0 0
    %501 = vmatprep.subr.bf16.mxu0 0
    %502 = vmatpush1.bf16.msra.mxu0 0
    %503 = vmatprep.subr.bf16.mxu0 0
    %504 = vmatpush1.bf16.msra.mxu0 0
    %505 = vmatprep.mubr.bf16.mxu0 0
    %506 = vmatmul.mubr.bf16.gmra.mrb[0].mxu0 %v405
    %v507 = vpop.f32.mrb[0].mxu0
    %v508 = vadd.f32 0.0, %v507
    %v509 = vpop.f32.mrb[0].mxu0
    %v510 = vpop.f32.mrb[0].mxu0
    %v511 = vadd.f32 0.0, %v510
    %v512 = vpop.f32.mrb[0].mxu0
    %513 = vmatprep.mubr.bf16.mxu0 0
    %514 = vmatmul.mubr.bf16.gmra.mrb[0].mxu0 %v406
    %v515 = vpop.f32.mrb[0].mxu0
    %v516 = vadd.f32 0.0, %v515
    %v517 = vpop.f32.mrb[0].mxu0
    %v518 = vpop.f32.mrb[0].mxu0
    %v519 = vadd.f32 0.0, %v518
    %v520 = vpop.f32.mrb[0].mxu0
    %521 = vmatprep.mubr.bf16.mxu0 0
    %522 = vmatmul.mubr.bf16.gmra.mrb[0].mxu0 %v407
    %v523 = vpop.f32.mrb[0].mxu0
    %v524 = vadd.f32 0.0, %v523
    %v525 = vpop.f32.mrb[0].mxu0
    %v526 = vpop.f32.mrb[0].mxu0
    %v527 = vadd.f32 0.0, %v526
    %v528 = vpop.f32.mrb[0].mxu0
    %529 = vmatprep.mubr.bf16.mxu0 0
    %530 = vmatmul.mubr.bf16.gmra.mrb[0].mxu0 %v408
    %v531 = vpop.f32.mrb[0].mxu0
    %v532 = vadd.f32 0.0, %v531
    %v533 = vpop.f32.mrb[0].mxu0
    %v534 = vpop.f32.mrb[0].mxu0
    %v535 = vadd.f32 0.0, %v534
    %v536 = vpop.f32.mrb[0].mxu0
    %537 = vdwg.mxu0
    %v538 = vpack.c.bf16 %v511, %v508
    %v539 = vpack.c.bf16 %v519, %v516
    %v540 = vpack.c.bf16 %v527, %v524
    %v541 = vpack.c.bf16 %v535, %v532
    %v542 = vld [vmem:[%s5] sm:$0x1]
    %v544 = vlaneseq
    %v545 = vshrl.u32 %v544, 7
    %v546 = vsub.s32 0, %v545
    %v547 = vrot.slane %v542, %v546
    %549 = vmatprep.subr.bf16.mxu0 0
    %550 = vmatpush1.bf16.msra.mxu0 %v538
    %551 = vmatprep.subr.bf16.mxu0 0
    %552 = vmatpush1.bf16.msra.mxu0 %v539
    %553 = vmatprep.subr.bf16.mxu0 0
    %554 = vmatpush1.bf16.msra.mxu0 %v540
    %555 = vmatprep.subr.bf16.mxu0 0
    %556 = vmatpush1.bf16.msra.mxu0 %v541
    %557 = vmatprep.subr.bf16.mxu0 0
    %558 = vmatpush1.bf16.msra.mxu0 0
    %559 = vmatprep.subr.bf16.mxu0 0
    %560 = vmatpush1.bf16.msra.mxu0 0
    %561 = vmatprep.subr.bf16.mxu0 0
    %562 = vmatpush1.bf16.msra.mxu0 0
    %563 = vmatprep.subr.bf16.mxu0 0
    %564 = vmatpush1.bf16.msra.mxu0 0
    %565 = vmatprep.subr.bf16.mxu0 0
    %566 = vmatpush1.bf16.msra.mxu0 0
    %567 = vmatprep.subr.bf16.mxu0 0
    %568 = vmatpush1.bf16.msra.mxu0 0
    %569 = vmatprep.subr.bf16.mxu0 0
    %570 = vmatpush1.bf16.msra.mxu0 0
    %571 = vmatprep.subr.bf16.mxu0 0
    %572 = vmatpush1.bf16.msra.mxu0 0
    %573 = vmatprep.subr.bf16.mxu0 0
    %574 = vmatpush1.bf16.msra.mxu0 0
    %575 = vmatprep.subr.bf16.mxu0 0
    %576 = vmatpush1.bf16.msra.mxu0 0
    %577 = vmatprep.subr.bf16.mxu0 0
    %578 = vmatpush1.bf16.msra.mxu0 0
    %579 = vmatprep.subr.bf16.mxu0 0
    %580 = vmatpush1.bf16.msra.mxu0 0
    %581 = vmatprep.mubr.bf16.mxu0 0
    %582 = vmatmul.mubr.bf16.gmra.mrb[0].mxu0 %v181
    %v583 = vpop.f32.mrb[0].mxu0
    %v584 = vadd.f32 %v547, %v583
    %v585 = vpop.f32.mrb[0].mxu0
    %v586 = vpop.f32.mrb[0].mxu0
    %v587 = vadd.f32 %v547, %v586
    %v588 = vpop.f32.mrb[0].mxu0
    %589 = vmatprep.mubr.bf16.mxu0 0
    %590 = vmatmul.mubr.bf16.gmra.mrb[0].mxu0 %v184
    %v591 = vpop.f32.mrb[0].mxu0
    %v592 = vadd.f32 %v547, %v591
    %v593 = vpop.f32.mrb[0].mxu0
    %v594 = vpop.f32.mrb[0].mxu0
    %v595 = vadd.f32 %v547, %v594
    %v596 = vpop.f32.mrb[0].mxu0
    %597 = vmatprep.mubr.bf16.mxu0 0
    %598 = vmatmul.mubr.bf16.gmra.mrb[0].mxu0 %v187
    %v599 = vpop.f32.mrb[0].mxu0
    %v600 = vadd.f32 %v547, %v599
    %v601 = vpop.f32.mrb[0].mxu0
    %v602 = vpop.f32.mrb[0].mxu0
    %v603 = vadd.f32 %v547, %v602
    %v604 = vpop.f32.mrb[0].mxu0
    %605 = vmatprep.mubr.bf16.mxu0 0
    %606 = vmatmul.mubr.bf16.gmra.mrb[0].mxu0 %v190
    %v607 = vpop.f32.mrb[0].mxu0
    %v608 = vadd.f32 %v547, %v607
    %v609 = vpop.f32.mrb[0].mxu0
    %v610 = vpop.f32.mrb[0].mxu0
    %v611 = vadd.f32 %v547, %v610
    %v612 = vpop.f32.mrb[0].mxu0
    %613 = vdwg.mxu0
    %v614 = vmax.f32 %v584, 0.0
    %v615 = vmax.f32 %v587, 0.0
    %v616 = vmax.f32 %v592, 0.0
    %v617 = vmax.f32 %v595, 0.0
    %v618 = vmax.f32 %v600, 0.0
    %v619 = vmax.f32 %v603, 0.0
    %v620 = vmax.f32 %v608, 0.0
    %v621 = vmax.f32 %v611, 0.0
    %v622 = vpack.c.bf16 %v615, %v614
    %v623 = vpack.c.bf16 %v617, %v616
    %v624 = vpack.c.bf16 %v619, %v618
    %v625 = vpack.c.bf16 %v621, %v620
    %v626 = vld [vmem:[#allocation10] sm:$0xf]
    %v627 = vld [vmem:[#allocation10 + $0x4] sm:$0xf]
    %v628 = vld [vmem:[#allocation10 + $0x8] sm:$0xf]
    %v629 = vld [vmem:[#allocation10 + $0xc] sm:$0xf]
    %v630 = vld [vmem:[#allocation10 + $0x10] sm:$0xf]
    %v631 = vld [vmem:[#allocation10 + $0x14] sm:$0xf]
    %v632 = vld [vmem:[#allocation10 + $0x18] sm:$0xf]
    %v633 = vld [vmem:[#allocation10 + $0x1c] sm:$0xf]
    %v634 = vld [vmem:[#allocation10 + $0x20] sm:$0xf]
    %v635 = vld [vmem:[#allocation10 + $0x24] sm:$0xf]
    %v636 = vld [vmem:[#allocation10 + $0x28] sm:$0xf]
    %v637 = vld [vmem:[#allocation10 + $0x2c] sm:$0xf]
    %v638 = vld [vmem:[#allocation10 + $0x30] sm:$0xf]
    %v639 = vld [vmem:[#allocation10 + $0x34] sm:$0xf]
    %v640 = vld [vmem:[#allocation10 + $0x38] sm:$0xf]
    %v641 = vld [vmem:[#allocation10 + $0x3c] sm:$0xf]
    %v658 = vunpack.c.l.b16 %v626
    %v659 = vunpack.c.l.b16 %v627
    %v660 = vunpack.c.l.b16 %v628
    %v661 = vunpack.c.l.b16 %v629
    %v662 = vunpack.c.l.b16 %v630
    %v663 = vunpack.c.l.b16 %v631
    %v664 = vunpack.c.l.b16 %v632
    %v665 = vunpack.c.l.b16 %v633
    %v666 = vunpack.c.l.b16 %v634
    %v667 = vunpack.c.l.b16 %v635
    %v668 = vunpack.c.l.b16 %v636
    %v669 = vunpack.c.l.b16 %v637
    %v670 = vunpack.c.l.b16 %v638
    %v671 = vunpack.c.l.b16 %v639
    %v672 = vunpack.c.l.b16 %v640
    %v673 = vunpack.c.l.b16 %v641
    %v674 = vpack.c.b16 %v659, %v658
    %v675 = vpack.c.b16 %v661, %v660
    %v676 = vpack.c.b16 %v663, %v662
    %v677 = vpack.c.b16 %v665, %v664
    %v678 = vpack.c.b16 %v667, %v666
    %v679 = vpack.c.b16 %v669, %v668
    %v680 = vpack.c.b16 %v671, %v670
    %v681 = vpack.c.b16 %v673, %v672
    %690 = vmatprep.subr.bf16.mxu0 0
    %691 = vmatpush1.bf16.msra.mxu0 %v674
    %692 = vmatprep.subr.bf16.mxu0 0
    %693 = vmatpush1.bf16.msra.mxu0 %v675
    %694 = vmatprep.subr.bf16.mxu0 0
    %695 = vmatpush1.bf16.msra.mxu0 %v676
    %696 = vmatprep.subr.bf16.mxu0 0
    %697 = vmatpush1.bf16.msra.mxu0 %v677
    %698 = vmatprep.subr.bf16.mxu0 0
    %699 = vmatpush1.bf16.msra.mxu0 %v678
    %700 = vmatprep.subr.bf16.mxu0 0
    %701 = vmatpush1.bf16.msra.mxu0 %v679
    %702 = vmatprep.subr.bf16.mxu0 0
    %703 = vmatpush1.bf16.msra.mxu0 %v680
    %704 = vmatprep.subr.bf16.mxu0 0
    %705 = vmatpush1.bf16.msra.mxu0 %v681
    %706 = vmatprep.subr.bf16.mxu0 0
    %707 = vmatpush1.bf16.msra.mxu0 0
    %708 = vmatprep.subr.bf16.mxu0 0
    %709 = vmatpush1.bf16.msra.mxu0 0
    %710 = vmatprep.subr.bf16.mxu0 0
    %711 = vmatpush1.bf16.msra.mxu0 0
    %712 = vmatprep.subr.bf16.mxu0 0
    %713 = vmatpush1.bf16.msra.mxu0 0
    %714 = vmatprep.subr.bf16.mxu0 0
    %715 = vmatpush1.bf16.msra.mxu0 0
    %716 = vmatprep.subr.bf16.mxu0 0
    %717 = vmatpush1.bf16.msra.mxu0 0
    %718 = vmatprep.subr.bf16.mxu0 0
    %719 = vmatpush1.bf16.msra.mxu0 0
    %720 = vmatprep.subr.bf16.mxu0 0
    %721 = vmatpush1.bf16.msra.mxu0 0
    %722 = vmatprep.mubr.bf16.mxu0 0
    %723 = vmatmul.mubr.bf16.gmra.mrb[0].mxu0 %v622
    %v724 = vpop.f32.mrb[0].mxu0
    %v725 = vadd.f32 0.0, %v724
    %v726 = vpop.f32.mrb[0].mxu0
    %v727 = vpop.f32.mrb[0].mxu0
    %v728 = vadd.f32 0.0, %v727
    %v729 = vpop.f32.mrb[0].mxu0
    %730 = vmatprep.mubr.bf16.mxu0 0
    %731 = vmatmul.mubr.bf16.gmra.mrb[0].mxu0 %v623
    %v732 = vpop.f32.mrb[0].mxu0
    %v733 = vadd.f32 0.0, %v732
    %v734 = vpop.f32.mrb[0].mxu0
    %v735 = vpop.f32.mrb[0].mxu0
    %v736 = vadd.f32 0.0, %v735
    %v737 = vpop.f32.mrb[0].mxu0
    %738 = vmatprep.mubr.bf16.mxu0 0
    %739 = vmatmul.mubr.bf16.gmra.mrb[0].mxu0 %v624
    %v740 = vpop.f32.mrb[0].mxu0
    %v741 = vadd.f32 0.0, %v740
    %v742 = vpop.f32.mrb[0].mxu0
    %v743 = vpop.f32.mrb[0].mxu0
    %v744 = vadd.f32 0.0, %v743
    %v745 = vpop.f32.mrb[0].mxu0
    %746 = vmatprep.mubr.bf16.mxu0 0
    %747 = vmatmul.mubr.bf16.gmra.mrb[0].mxu0 %v625
    %v748 = vpop.f32.mrb[0].mxu0
    %v749 = vadd.f32 0.0, %v748
    %v750 = vpop.f32.mrb[0].mxu0
    %v751 = vpop.f32.mrb[0].mxu0
    %v752 = vadd.f32 0.0, %v751
    %v753 = vpop.f32.mrb[0].mxu0
    %754 = vdwg.mxu0
    %v755 = vpack.c.bf16 %v728, %v725
    %v756 = vpack.c.bf16 %v736, %v733
    %v757 = vpack.c.bf16 %v744, %v741
    %v758 = vpack.c.bf16 %v752, %v749
    %v759 = vld [vmem:[%s7] sm:$0x1]
    %v761 = vlaneseq
    %v762 = vshrl.u32 %v761, 7
    %v763 = vsub.s32 0, %v762
    %v764 = vrot.slane %v759, %v763
    %766 = vmatprep.subr.bf16.mxu0 0
    %767 = vmatpush1.bf16.msra.mxu0 %v755
    %768 = vmatprep.subr.bf16.mxu0 0
    %769 = vmatpush1.bf16.msra.mxu0 %v756
    %770 = vmatprep.subr.bf16.mxu0 0
    %771 = vmatpush1.bf16.msra.mxu0 %v757
    %772 = vmatprep.subr.bf16.mxu0 0
    %773 = vmatpush1.bf16.msra.mxu0 %v758
    %774 = vmatprep.subr.bf16.mxu0 0
    %775 = vmatpush1.bf16.msra.mxu0 0
    %776 = vmatprep.subr.bf16.mxu0 0
    %777 = vmatpush1.bf16.msra.mxu0 0
    %778 = vmatprep.subr.bf16.mxu0 0
    %779 = vmatpush1.bf16.msra.mxu0 0
    %780 = vmatprep.subr.bf16.mxu0 0
    %781 = vmatpush1.bf16.msra.mxu0 0
    %782 = vmatprep.subr.bf16.mxu0 0
    %783 = vmatpush1.bf16.msra.mxu0 0
    %784 = vmatprep.subr.bf16.mxu0 0
    %785 = vmatpush1.bf16.msra.mxu0 0
    %786 = vmatprep.subr.bf16.mxu0 0
    %787 = vmatpush1.bf16.msra.mxu0 0
    %788 = vmatprep.subr.bf16.mxu0 0
    %789 = vmatpush1.bf16.msra.mxu0 0
    %790 = vmatprep.subr.bf16.mxu0 0
    %791 = vmatpush1.bf16.msra.mxu0 0
    %792 = vmatprep.subr.bf16.mxu0 0
    %793 = vmatpush1.bf16.msra.mxu0 0
    %794 = vmatprep.subr.bf16.mxu0 0
    %795 = vmatpush1.bf16.msra.mxu0 0
    %796 = vmatprep.subr.bf16.mxu0 0
    %797 = vmatpush1.bf16.msra.mxu0 0
    %798 = vmatprep.mubr.bf16.mxu0 0
    %799 = vmatmul.mubr.bf16.gmra.mrb[0].mxu0 %v181
    %v800 = vpop.f32.mrb[0].mxu0
    %v801 = vadd.f32 %v764, %v800
    %v802 = vpop.f32.mrb[0].mxu0
    %v803 = vpop.f32.mrb[0].mxu0
    %v804 = vadd.f32 %v764, %v803
    %v805 = vpop.f32.mrb[0].mxu0
    %806 = vmatprep.mubr.bf16.mxu0 0
    %807 = vmatmul.mubr.bf16.gmra.mrb[0].mxu0 %v184
    %v808 = vpop.f32.mrb[0].mxu0
    %v809 = vadd.f32 %v764, %v808
    %v810 = vpop.f32.mrb[0].mxu0
    %v811 = vpop.f32.mrb[0].mxu0
    %v812 = vadd.f32 %v764, %v811
    %v813 = vpop.f32.mrb[0].mxu0
    %814 = vmatprep.mubr.bf16.mxu0 0
    %815 = vmatmul.mubr.bf16.gmra.mrb[0].mxu0 %v187
    %v816 = vpop.f32.mrb[0].mxu0
    %v817 = vadd.f32 %v764, %v816
    %v818 = vpop.f32.mrb[0].mxu0
    %v819 = vpop.f32.mrb[0].mxu0
    %v820 = vadd.f32 %v764, %v819
    %v821 = vpop.f32.mrb[0].mxu0
    %822 = vmatprep.mubr.bf16.mxu0 0
    %823 = vmatmul.mubr.bf16.gmra.mrb[0].mxu0 %v190
    %v824 = vpop.f32.mrb[0].mxu0
    %v825 = vadd.f32 %v764, %v824
    %v826 = vpop.f32.mrb[0].mxu0
    %v827 = vpop.f32.mrb[0].mxu0
    %v828 = vadd.f32 %v764, %v827
    %v829 = vpop.f32.mrb[0].mxu0
    %830 = vdwg.mxu0
    %v831 = vmax.f32 %v801, 0.0
    %v832 = vmax.f32 %v804, 0.0
    %v833 = vmax.f32 %v809, 0.0
    %v834 = vmax.f32 %v812, 0.0
    %v835 = vmax.f32 %v817, 0.0
    %v836 = vmax.f32 %v820, 0.0
    %v837 = vmax.f32 %v825, 0.0
    %v838 = vmax.f32 %v828, 0.0
    %v839 = vadd.f32 %v831, %v397
    %v840 = vadd.f32 %v832, %v398
    %v841 = vadd.f32 %v833, %v399
    %v842 = vadd.f32 %v834, %v400
    %v843 = vadd.f32 %v835, %v401
    %v844 = vadd.f32 %v836, %v402
    %v845 = vadd.f32 %v837, %v403
    %v846 = vadd.f32 %v838, %v404
    %v847 = vpack.c.bf16 %v840, %v839
    %v848 = vpack.c.bf16 %v842, %v841
    %v849 = vpack.c.bf16 %v844, %v843
    %v850 = vpack.c.bf16 %v846, %v845
    %v851 = vld [vmem:[#allocation11] sm:$0xf]
    %v852 = vld [vmem:[#allocation11 + $0x4] sm:$0xf]
    %v853 = vld [vmem:[#allocation11 + $0x8] sm:$0xf]
    %v854 = vld [vmem:[#allocation11 + $0xc] sm:$0xf]
    %v855 = vld [vmem:[#allocation11 + $0x10] sm:$0xf]
    %v856 = vld [vmem:[#allocation11 + $0x14] sm:$0xf]
    %v857 = vld [vmem:[#allocation11 + $0x18] sm:$0xf]
    %v858 = vld [vmem:[#allocation11 + $0x1c] sm:$0xf]
    %v859 = vld [vmem:[#allocation11 + $0x20] sm:$0xf]
    %v860 = vld [vmem:[#allocation11 + $0x24] sm:$0xf]
    %v861 = vld [vmem:[#allocation11 + $0x28] sm:$0xf]
    %v862 = vld [vmem:[#allocation11 + $0x2c] sm:$0xf]
    %v863 = vld [vmem:[#allocation11 + $0x30] sm:$0xf]
    %v864 = vld [vmem:[#allocation11 + $0x34] sm:$0xf]
    %v865 = vld [vmem:[#allocation11 + $0x38] sm:$0xf]
    %v866 = vld [vmem:[#allocation11 + $0x3c] sm:$0xf]
    %v867 = vld [vmem:[%s9] sm:$0x1]
    %v869 = vlaneseq
    %v870 = vshrl.u32 %v869, 7
    %v871 = vsub.s32 0, %v870
    %v872 = vrot.slane %v867, %v871
    %v890 = vunpack.c.l.b16 %v851
    %v891 = vunpack.c.l.b16 %v852
    %v892 = vunpack.c.l.b16 %v853
    %v893 = vunpack.c.l.b16 %v854
    %v894 = vunpack.c.l.b16 %v855
    %v895 = vunpack.c.l.b16 %v856
    %v896 = vunpack.c.l.b16 %v857
    %v897 = vunpack.c.l.b16 %v858
    %v898 = vunpack.c.l.b16 %v859
    %v899 = vunpack.c.l.b16 %v860
    %v900 = vunpack.c.l.b16 %v861
    %v901 = vunpack.c.l.b16 %v862
    %v902 = vunpack.c.l.b16 %v863
    %v903 = vunpack.c.l.b16 %v864
    %v904 = vunpack.c.l.b16 %v865
    %v905 = vunpack.c.l.b16 %v866
    %v906 = vpack.c.b16 %v891, %v890
    %v907 = vpack.c.b16 %v893, %v892
    %v908 = vpack.c.b16 %v895, %v894
    %v909 = vpack.c.b16 %v897, %v896
    %v910 = vpack.c.b16 %v899, %v898
    %v911 = vpack.c.b16 %v901, %v900
    %v912 = vpack.c.b16 %v903, %v902
    %v913 = vpack.c.b16 %v905, %v904
    %922 = vmatprep.subr.bf16.mxu0 0
    %923 = vmatpush1.bf16.msra.mxu0 %v906
    %924 = vmatprep.subr.bf16.mxu0 0
    %925 = vmatpush1.bf16.msra.mxu0 %v907
    %926 = vmatprep.subr.bf16.mxu0 0
    %927 = vmatpush1.bf16.msra.mxu0 %v908
    %928 = vmatprep.subr.bf16.mxu0 0
    %929 = vmatpush1.bf16.msra.mxu0 %v909
    %930 = vmatprep.subr.bf16.mxu0 0
    %931 = vmatpush1.bf16.msra.mxu0 %v910
    %932 = vmatprep.subr.bf16.mxu0 0
    %933 = vmatpush1.bf16.msra.mxu0 %v911
    %934 = vmatprep.subr.bf16.mxu0 0
    %935 = vmatpush1.bf16.msra.mxu0 %v912
    %936 = vmatprep.subr.bf16.mxu0 0
    %937 = vmatpush1.bf16.msra.mxu0 %v913
    %938 = vmatprep.subr.bf16.mxu0 0
    %939 = vmatpush1.bf16.msra.mxu0 0
    %940 = vmatprep.subr.bf16.mxu0 0
    %941 = vmatpush1.bf16.msra.mxu0 0
    %942 = vmatprep.subr.bf16.mxu0 0
    %943 = vmatpush1.bf16.msra.mxu0 0
    %944 = vmatprep.subr.bf16.mxu0 0
    %945 = vmatpush1.bf16.msra.mxu0 0
    %946 = vmatprep.subr.bf16.mxu0 0
    %947 = vmatpush1.bf16.msra.mxu0 0
    %948 = vmatprep.subr.bf16.mxu0 0
    %949 = vmatpush1.bf16.msra.mxu0 0
    %950 = vmatprep.subr.bf16.mxu0 0
    %951 = vmatpush1.bf16.msra.mxu0 0
    %952 = vmatprep.subr.bf16.mxu0 0
    %953 = vmatpush1.bf16.msra.mxu0 0
    %954 = vmatprep.mubr.bf16.mxu0 0
    %955 = vmatmul.mubr.bf16.gmra.mrb[0].mxu0 %v847
    %v956 = vpop.f32.mrb[0].mxu0
    %v957 = vadd.f32 %v872, %v956
    %v958 = vpop.f32.mrb[0].mxu0
    %v959 = vpop.f32.mrb[0].mxu0
    %v960 = vadd.f32 %v872, %v959
    %v961 = vpop.f32.mrb[0].mxu0
    %962 = vmatprep.mubr.bf16.mxu0 0
    %963 = vmatmul.mubr.bf16.gmra.mrb[0].mxu0 %v848
    %v964 = vpop.f32.mrb[0].mxu0
    %v965 = vadd.f32 %v872, %v964
    %v966 = vpop.f32.mrb[0].mxu0
    %v967 = vpop.f32.mrb[0].mxu0
    %v968 = vadd.f32 %v872, %v967
    %v969 = vpop.f32.mrb[0].mxu0
    %970 = vmatprep.mubr.bf16.mxu0 0
    %971 = vmatmul.mubr.bf16.gmra.mrb[0].mxu0 %v849
    %v972 = vpop.f32.mrb[0].mxu0
    %v973 = vadd.f32 %v872, %v972
    %v974 = vpop.f32.mrb[0].mxu0
    %v975 = vpop.f32.mrb[0].mxu0
    %v976 = vadd.f32 %v872, %v975
    %v977 = vpop.f32.mrb[0].mxu0
    %978 = vmatprep.mubr.bf16.mxu0 0
    %979 = vmatmul.mubr.bf16.gmra.mrb[0].mxu0 %v850
    %v980 = vpop.f32.mrb[0].mxu0
    %v981 = vadd.f32 %v872, %v980
    %v982 = vpop.f32.mrb[0].mxu0
    %v983 = vpop.f32.mrb[0].mxu0
    %v984 = vadd.f32 %v872, %v983
    %v985 = vpop.f32.mrb[0].mxu0
    %986 = vdwg.mxu0
    %v987 = vxor.u32 %v957, 2147483648
    %v988 = vxor.u32 %v960, 2147483648
    %v989 = vxor.u32 %v965, 2147483648
    %v990 = vxor.u32 %v968, 2147483648
    %v991 = vxor.u32 %v973, 2147483648
    %v992 = vxor.u32 %v976, 2147483648
    %v993 = vxor.u32 %v981, 2147483648
    %v994 = vxor.u32 %v984, 2147483648
    %v995 = vmul.f32 %v987, 1.442695
    %v996 = vpow.pop %v995
    %v997 = vmul.f32 %v988, 1.442695
    %v998 = vpow.pop %v997
    %v999 = vmul.f32 %v989, 1.442695
    %v1000 = vpow.pop %v999
    %v1001 = vmul.f32 %v990, 1.442695
    %v1002 = vpow.pop %v1001
    %v1003 = vmul.f32 %v991, 1.442695
    %v1004 = vpow.pop %v1003
    %v1005 = vmul.f32 %v992, 1.442695
    %v1006 = vpow.pop %v1005
    %v1007 = vmul.f32 %v993, 1.442695
    %v1008 = vpow.pop %v1007
    %v1009 = vmul.f32 %v994, 1.442695
    %v1010 = vpow.pop %v1009
    %v1011 = vadd.f32 %v996, 1.0
    %v1012 = vadd.f32 %v998, 1.0
    %v1013 = vadd.f32 %v1000, 1.0
    %v1014 = vadd.f32 %v1002, 1.0
    %v1015 = vadd.f32 %v1004, 1.0
    %v1016 = vadd.f32 %v1006, 1.0
    %v1017 = vadd.f32 %v1008, 1.0
    %v1018 = vadd.f32 %v1010, 1.0
    %v1019 = vrcp.pop %v1011
    %v1020 = vmul.f32 1.0, %v1019
    %v1021 = vrcp.pop %v1012
    %v1022 = vmul.f32 1.0, %v1021
    %v1023 = vrcp.pop %v1013
    %v1024 = vmul.f32 1.0, %v1023
    %v1025 = vrcp.pop %v1014
    %v1026 = vmul.f32 1.0, %v1025
    %v1027 = vrcp.pop %v1015
    %v1028 = vmul.f32 1.0, %v1027
    %v1029 = vrcp.pop %v1016
    %v1030 = vmul.f32 1.0, %v1029
    %v1031 = vrcp.pop %v1017
    %v1032 = vmul.f32 1.0, %v1031
    %v1033 = vrcp.pop %v1018
    %v1034 = vmul.f32 1.0, %v1033
    %v1035 = vmul.f32 %v1020, 10.0
    %v1036 = vmul.f32 %v1022, 10.0
    %v1037 = vmul.f32 %v1024, 10.0
    %v1038 = vmul.f32 %v1026, 10.0
    %v1039 = vmul.f32 %v1028, 10.0
    %v1040 = vmul.f32 %v1030, 10.0
    %v1041 = vmul.f32 %v1032, 10.0
    %v1042 = vmul.f32 %v1034, 10.0
    %1043 = vst [vmem:[#allocation13] sm:$0xff] %v1035
    %1044 = vst [vmem:[#allocation13 + $0x8] sm:$0xff] %v1036
    %1045 = vst [vmem:[#allocation13 + $0x10] sm:$0xff] %v1037
    %1046 = vst [vmem:[#allocation13 + $0x18] sm:$0xff] %v1038
    %1047 = vst [vmem:[#allocation13 + $0x20] sm:$0xff] %v1039
    %1048 = vst [vmem:[#allocation13 + $0x28] sm:$0xff] %v1040
    %1049 = vst [vmem:[#allocation13 + $0x30] sm:$0xff] %v1041
    %1050 = vst [vmem:[#allocation13 + $0x38] sm:$0xff] %v1042
    // Predicated region
    $region66: #{tpu_custom_call.1} parent=1 // pred_check
      _
    $region67: #{tpu_custom_call.1} parent=1 // pred_check_branch
      %1052 = sbr.rel (0) target = $region69
    $region68: #{tpu_custom_call.1} parent=1 // pred_region
      %s1054 = ssub.s32 1024, 1024
      %1055 = vsyncadd [#allocation4], %s1054
      %s1056 = sshll.u32 [#allocation13], 4
      %s1057 = int_to_ptr.vmem [resolvable:$true] %s1056
      %1062 = dma.vmem_to_hbm [thread:$0]  %s1057, 1024, %s10, [#allocation4], 128, 128, 8
    $region69: #{tpu_custom_call.1} parent=1 // pred_fallthru
      _
    // Predicated region
    $region70: #{tpu_custom_call.1} parent=1 // pred_check
      _
    $region71: #{tpu_custom_call.1} parent=1 // pred_check_branch
      %1064 = sbr.rel (0) target = $region73
    $region72: #{tpu_custom_call.1} parent=1 // pred_region
      %1065 = dma.done [#allocation4], 1024
    $region73: #{tpu_custom_call.1} parent=1 // pred_fallthru
      _
    %1066 = vsyncpa [#allocation3], 1
    %1067 = vsyncpa [#allocation6], 1
    %1068 = vsyncpa [#allocation9], 1
    %1069 = vsyncpa [#allocation12], 1
    %1070 = vsyncpa [#allocation4], 1

</llo_original>
